<compile_context>
chip_gen: v6e
topology: v6e:2x2x1
jax: 0.10.0
libtpu: 0.0.40
codegen_flags: <defaults>
</compile_context>

<pallas_src>
import functools

import jax
import jax.numpy as jnp
from jax.experimental import pallas as pl
from jax.experimental.pallas import tpu as pltpu

_MiB = 1024 * 1024


def _round_up(n, m):
    return ((n + m - 1) // m) * m


def _vmem_budget_bytes():
    """Usable VMEM budget for this kernel, derived from the actual chip."""
    cap = 0
    try:
        cap = int(getattr(pltpu.get_tpu_info(), "vmem_capacity_bytes", 0) or 0)
    except Exception:
        cap = 0
    if cap <= 0:
        cap = 64 * _MiB  # conservative floor (v7x); v5e/v6e have 128 MiB
    # Leave headroom for compiler-internal scratch / semaphores.
    return max(32 * _MiB, min(int(cap * 0.85), cap - 8 * _MiB))


def _choose_row_tile(rows, target):
    """Largest row tile that is a multiple of 8, <= target and, when possible,
    divides `rows` exactly (no row padding / output slice needed) while leaving
    >= 2 grid steps (megacore sharding + pipelining overlap)."""
    target = max(8, _round_up(min(target, max(rows, 1)), 8))
    if rows >= 8 and rows % 8 == 0:
        divs = [d for d in range(8, min(rows, target) + 1, 8) if rows % d == 0]
        if divs:
            tm = max(divs)
            if rows // tm < 2:  # prefer at least 2 grid iterations
                two_step = [d for d in divs if rows // d >= 2]
                if two_step:
                    tm = max(two_step)
            return tm
    return min(_round_up(rows, 8), target)


def _upsample_resident_kernel(x_ref, wt_ref, b_ref, o_ref, *, scale, d_pad):
    # x_ref : (tm, d_pad)            input row tile (native dtype, no upcast)
    # wt_ref: (d_pad, d_pad)         transposed weight (resident, single-buffered)
    # b_ref : (1, d_pad) float32     bias
    # o_ref : (tm, scale * d_pad)    column-tiled output: o[:, s*D:(s+1)*D] = y
    y = jnp.dot(x_ref[...], wt_ref[...], preferred_element_type=jnp.float32)
    y = (y + b_ref[...]).astype(o_ref.dtype)
    # repeat_interleave realized as `scale` full-lane, unmasked stores.
    for s in range(scale):
        o_ref[:, s * d_pad:(s + 1) * d_pad] = y


def _upsample_tiled_kernel(x_ref, wt_ref, b_ref, o_ref, y_ref):
    # Grid = (row_tiles, n_tiles, scale); s innermost reuses the y scratch so
    # the matmul runs once per (row tile, n tile) and is re-stored per repeat.
    # x_ref : (tm, d_pad)   wt_ref: (d_pad, tn)   b_ref: (1, tn)
    # o_ref : (tm, tn)      y_ref : (tm, tn) VMEM scratch
    @pl.when(pl.program_id(2) == 0)
    def _():
        y = jnp.dot(x_ref[...], wt_ref[...], preferred_element_type=jnp.float32)
        y_ref[...] = (y + b_ref[...]).astype(y_ref.dtype)

    o_ref[...] = y_ref[...]


def upsample(x, weight, bias, scale_factor=2, *, max_tile_rows=1024,
             tile_n=None, force_weight_tiling=False, compute_dtype=None):
    """x: (B, S, D); weight: (D, D) PyTorch Linear layout (out, in); bias: (D,)."""
    B, S, D = x.shape
    rows = B * S
    scale = int(scale_factor)
    out_dtype = x.dtype

    cdt = jnp.dtype(compute_dtype) if compute_dtype is not None else jnp.dtype(x.dtype)

    d_pad = _round_up(D, 128)
    budget = _vmem_budget_bytes()

    isz_x = cdt.itemsize
    isz_w = cdt.itemsize
    isz_o = jnp.dtype(out_dtype).itemsize

    # --- choose path: resident weight vs N-tiled weight -----------------------
    w_bytes = d_pad * d_pad * isz_w
    use_tiled = bool(force_weight_tiling) or (w_bytes > budget // 3)

    if use_tiled:
        if tile_n is not None:
            tn = int(tile_n)
            if tn % 128 != 0 or d_pad % tn != 0:
                raise ValueError("tile_n must be a multiple of 128 dividing the padded D")
        else:
            tn = 128
            for cand in (512, 256, 128):  # prefer >=256 for v6e/v7x 256-wide MXU
                if d_pad % cand == 0 and 2 * d_pad * cand * isz_w <= budget // 2:
                    tn = cand
                    break
    else:
        tn = d_pad

    # --- adaptive row tile (up to 1024 rows, VMEM-plan permitting) ------------
    def _plan_bytes(tm_cand, w_buffers):
        if use_tiled:
            return (2 * tm_cand * d_pad * isz_x          # x tiles (double buffered)
                    + 3 * tm_cand * tn * isz_o           # out tiles (2) + y scratch
                    + 2 * d_pad * tn * isz_w             # weight column tiles
                    + 2 * tn * 4                         # bias tiles
                    + tm_cand * tn * 4)                  # f32 matmul result
        return (2 * tm_cand * d_pad * isz_x              # x tiles (double buffered)
                + 2 * tm_cand * scale * d_pad * isz_o    # out tiles (double buffered)
                + w_buffers * d_pad * d_pad * isz_w      # resident W^T
                + w_buffers * d_pad * 4                  # bias
                + tm_cand * d_pad * 4)                   # f32 matmul result

    tm = _choose_row_tile(rows, 8)
    for target in (1024, 768, 512, 384, 256, 128, 64, 32, 16, 8):
        if target > int(max_tile_rows):
            continue
        cand = _choose_row_tile(rows, target)
        if _plan_bytes(cand, 1) <= budget:
            tm = cand
            break
    rows_pad = _round_up(rows, tm)

    # --- build operands (pad only when actually needed) -----------------------
    x2d = x.reshape(rows, D)
    wt = weight.T  # (in, out): kernel computes x @ W^T
    if compute_dtype is not None:
        x2d = x2d.astype(cdt)
        wt = wt.astype(cdt)
    b2d = bias.astype(jnp.float32).reshape(1, D)

    pad_rows = rows_pad - rows
    pad_cols = d_pad - D
    if pad_rows or pad_cols:
        x2d = jnp.pad(x2d, ((0, pad_rows), (0, pad_cols)))
    if pad_cols:
        wt = jnp.pad(wt, ((0, pad_cols), (0, pad_cols)))
        b2d = jnp.pad(b2d, ((0, 0), (0, pad_cols)))

    # --- pallas_call builders --------------------------------------------------
    def _run_resident(weight_pipeline_mode):
        spec_kwargs = {}
        w_buffers = 2
        if weight_pipeline_mode is not None:
            spec_kwargs = dict(pipeline_mode=weight_pipeline_mode)
            w_buffers = 1
        need = _plan_bytes(tm, w_buffers)
        vmem_limit = int(min(budget, max(32 * _MiB, 2 * need)))
        kernel = functools.partial(_upsample_resident_kernel, scale=scale, d_pad=d_pad)
        return pl.pallas_call(
            kernel,
            out_shape=jax.ShapeDtypeStruct((rows_pad, scale * d_pad), out_dtype),
            grid_spec=pltpu.PrefetchScalarGridSpec(
                num_scalar_prefetch=0,
                grid=(rows_pad // tm,),
                in_specs=[
                    pl.BlockSpec((tm, d_pad), lambda i: (i, 0)),                     # x row tile
                    pl.BlockSpec((d_pad, d_pad), lambda i: (0, 0), **spec_kwargs),   # W^T resident
                    pl.BlockSpec((1, d_pad), lambda i: (0, 0), **spec_kwargs),       # bias resident
                ],
                out_specs=pl.BlockSpec((tm, scale * d_pad), lambda i: (i, 0)),
            ),
            compiler_params=pltpu.CompilerParams(
                dimension_semantics=("parallel",),
                vmem_limit_bytes=vmem_limit,
            ),
        )(x2d, wt, b2d)

    def _run_tiled():
        n_tiles = d_pad // tn
        need = _plan_bytes(tm, 1)
        vmem_limit = int(min(budget, max(32 * _MiB, 2 * need)))
        return pl.pallas_call(
            _upsample_tiled_kernel,
            out_shape=jax.ShapeDtypeStruct((rows_pad, scale * d_pad), out_dtype),
            grid_spec=pltpu.PrefetchScalarGridSpec(
                num_scalar_prefetch=0,
                grid=(rows_pad // tm, n_tiles, scale),
                in_specs=[
                    pl.BlockSpec((tm, d_pad), lambda i, n, s: (i, 0)),   # x row tile
                    pl.BlockSpec((d_pad, tn), lambda i, n, s: (0, n)),   # W^T column tile
                    pl.BlockSpec((1, tn), lambda i, n, s: (0, n)),       # bias tile
                ],
                out_specs=pl.BlockSpec((tm, tn),
                                       lambda i, n, s: (i, s * n_tiles + n)),
                scratch_shapes=[pltpu.VMEM((tm, tn), out_dtype)],
            ),
            compiler_params=pltpu.CompilerParams(
                dimension_semantics=("parallel", "arbitrary", "arbitrary"),
                vmem_limit_bytes=vmem_limit,
            ),
        )(x2d, wt, b2d)

    if use_tiled:
        out2d = _run_tiled()
    else:
        try:
            out2d = _run_resident(pl.Buffered(1))   # single-buffer constant-index W^T/bias
        except Exception:
            out2d = _run_resident(None)             # fallback: default double buffering

    # (rows_pad, scale*D_pad) -> (rows, scale, D) -> (B, S*scale, D)
    out = out2d.reshape(rows_pad, scale, d_pad)
    if rows_pad != rows:
        out = out[:rows]
    if d_pad != D:
        out = out[:, :, :D]
    return out.reshape(B, S * scale, D)


def upsample_ref(x, weight, bias, scale_factor=2):
    """Pure-JAX reference matching PyTorch semantics exactly."""
    x_rep = jnp.repeat(x, scale_factor, axis=1)  # repeat_interleave along dim=1
    return x_rep @ weight.T + bias               # nn.Linear


if __name__ == "__main__":
    base_key = jax.random.PRNGKey(0)

    def run_case(B, S, D, scale, **kw):
        k = jax.random.fold_in(base_key, D * 100 + scale)
        kx, kw_, kb = jax.random.split(k, 3)
        x = jax.random.normal(kx, (B, S, D), dtype=jnp.float32)
        # Deterministic synthetic Linear(D, D) parameters (PyTorch layout: (out, in)).
        weight = jax.random.normal(kw_, (D, D), dtype=jnp.float32) * 0.1
        bias = jax.random.normal(kb, (D,), dtype=jnp.float32) * 0.1

        out = upsample(x, weight, bias, scale_factor=scale, **kw)
        out = jax.block_until_ready(out)
        ref = upsample_ref(x, weight, bias, scale_factor=scale)
        assert out.shape == (B, S * scale, D), out.shape
        assert jnp.allclose(out, ref, atol=1e-4, rtol=1e-4), "mismatch vs reference"

    # Resident-weight path, padded D (D=32 -> 128), 2-step row grid.
    run_case(2, 8, 32, 2)
    # Resident-weight fast path: D % 128 == 0 and row-tile divides rows -> no pads/slices.
    run_case(2, 8, 128, 2)
    # N-tiled weight path (forced): D=160 -> d_pad=256 with tn=128 (2 column tiles), scale=3.
    run_case(2, 8, 160, 3, force_weight_tiling=True, tile_n=128)

    print("KERNEL_OK")
</pallas_src>

<mosaic_0001>
module attributes {stable_mosaic.version = 11 : i64} {
  func.func @_upsample_resident_kernel(%arg0: i32, %arg1: memref<8x128xf32, #tpu.memory_space<vmem>>, %arg2: memref<128x128xf32, #tpu.memory_space<vmem>>, %arg3: memref<1x128xf32, #tpu.memory_space<vmem>>, %arg4: memref<8x256xf32, #tpu.memory_space<vmem>>) attributes {dimension_semantics = [#tpu.dimension_semantics<parallel>], iteration_bounds = array<i64: 2>, scalar_prefetch = 0 : i64, scratch_operands = 0 : i64, tpu.core_type = #tpu.core_type<tc>, window_params = [{transform_indices = @transform_0, window_bounds = array<i64: 8, 128>}, {pipeline_mode = #tpu.pipeline_mode<synchronous>, transform_indices = @transform_1, window_bounds = array<i64: 128, 128>}, {pipeline_mode = #tpu.pipeline_mode<synchronous>, transform_indices = @transform_2, window_bounds = array<i64: 1, 128>}, {transform_indices = @transform_3, window_bounds = array<i64: 8, 256>}]} {
    %c0 = arith.constant 0 : index
    %c0_0 = arith.constant 0 : index
    %0 = vector.load %arg1[%c0, %c0_0] : memref<8x128xf32, #tpu.memory_space<vmem>>, vector<8x128xf32>
    %c0_1 = arith.constant 0 : index
    %c0_2 = arith.constant 0 : index
    %1 = vector.load %arg2[%c0_1, %c0_2] : memref<128x128xf32, #tpu.memory_space<vmem>>, vector<128x128xf32>
    %cst = arith.constant dense<0.000000e+00> : vector<8x128xf32>
    %2 = tpu.matmul %0, %1, %cst {dimension_numbers = #tpu.dot_dimension_numbers<[1], [0], [0], [1], [0, 0, 1, 1], [], []>} : vector<8x128xf32>, vector<128x128xf32>, vector<8x128xf32> -> vector<8x128xf32>
    %c0_3 = arith.constant 0 : index
    %c0_4 = arith.constant 0 : index
    %3 = vector.load %arg3[%c0_3, %c0_4] : memref<1x128xf32, #tpu.memory_space<vmem>>, vector<1x128xf32>
    %4 = vector.broadcast %3 : vector<1x128xf32> to vector<8x128xf32>
    %5 = arith.addf %2, %4 : vector<8x128xf32>
    %c0_5 = arith.constant 0 : index
    %c0_6 = arith.constant 0 : index
    %6 = vector.load %arg4[%c0_5, %c0_6] : memref<8x256xf32, #tpu.memory_space<vmem>>, vector<8x128xf32>
    tpu.vector_store %arg4[%c0_5, %c0_6], %5 {strides = array<i32>} : memref<8x256xf32, #tpu.memory_space<vmem>>, vector<8x128xf32>,
    %c0_7 = arith.constant 0 : index
    %c128 = arith.constant 128 : index
    %7 = vector.load %arg4[%c0_7, %c128] : memref<8x256xf32, #tpu.memory_space<vmem>>, vector<8x128xf32>
    tpu.vector_store %arg4[%c0_7, %c128], %5 {strides = array<i32>} : memref<8x256xf32, #tpu.memory_space<vmem>>, vector<8x128xf32>,
    return
  }
  func.func @transform_0(%arg0: i32) -> (i32, i32) {
    %c0_i32 = arith.constant 0 : i32
    %c0_i32_0 = arith.constant 0 : i32
    return %arg0, %c0_i32 : i32, i32
  }
  func.func @transform_1(%arg0: i32) -> (i32, i32) {
    %c0_i32 = arith.constant 0 : i32
    %c0_i32_0 = arith.constant 0 : i32
    %c0_i32_1 = arith.constant 0 : i32
    return %c0_i32, %c0_i32_0 : i32, i32
  }
  func.func @transform_2(%arg0: i32) -> (i32, i32) {
    %c0_i32 = arith.constant 0 : i32
    %c0_i32_0 = arith.constant 0 : i32
    %c0_i32_1 = arith.constant 0 : i32
    return %c0_i32, %c0_i32_0 : i32, i32
  }
  func.func @transform_3(%arg0: i32) -> (i32, i32) {
    %c0_i32 = arith.constant 0 : i32
    %c0_i32_0 = arith.constant 0 : i32
    return %arg0, %c0_i32 : i32, i32
  }
}

module attributes {stable_mosaic.version = 11 : i64} {
  func.func @_upsample_resident_kernel(%arg0: i32, %arg1: memref<8x128xf32, #tpu.memory_space<vmem>>, %arg2: memref<128x128xf32, #tpu.memory_space<vmem>>, %arg3: memref<1x128xf32, #tpu.memory_space<vmem>>, %arg4: memref<8x256xf32, #tpu.memory_space<vmem>>) attributes {dimension_semantics = [#tpu.dimension_semantics<parallel>], iteration_bounds = array<i64: 2>, scalar_prefetch = 0 : i64, scratch_operands = 0 : i64, tpu.core_type = #tpu.core_type<tc>, window_params = [{transform_indices = @transform_0, window_bounds = array<i64: 8, 128>}, {pipeline_mode = #tpu.pipeline_mode<synchronous>, transform_indices = @transform_1, window_bounds = array<i64: 128, 128>}, {pipeline_mode = #tpu.pipeline_mode<synchronous>, transform_indices = @transform_2, window_bounds = array<i64: 1, 128>}, {transform_indices = @transform_3, window_bounds = array<i64: 8, 256>}]} {
    %c0 = arith.constant 0 : index
    %c0_0 = arith.constant 0 : index
    %0 = vector.load %arg1[%c0, %c0_0] : memref<8x128xf32, #tpu.memory_space<vmem>>, vector<8x128xf32>
    %c0_1 = arith.constant 0 : index
    %c0_2 = arith.constant 0 : index
    %1 = vector.load %arg2[%c0_1, %c0_2] : memref<128x128xf32, #tpu.memory_space<vmem>>, vector<128x128xf32>
    %cst = arith.constant dense<0.000000e+00> : vector<8x128xf32>
    %2 = tpu.matmul %0, %1, %cst {dimension_numbers = #tpu.dot_dimension_numbers<[1], [0], [0], [1], [0, 0, 1, 1], [], []>} : vector<8x128xf32>, vector<128x128xf32>, vector<8x128xf32> -> vector<8x128xf32>
    %c0_3 = arith.constant 0 : index
    %c0_4 = arith.constant 0 : index
    %3 = vector.load %arg3[%c0_3, %c0_4] : memref<1x128xf32, #tpu.memory_space<vmem>>, vector<1x128xf32>
    %4 = vector.broadcast %3 : vector<1x128xf32> to vector<8x128xf32>
    %5 = arith.addf %2, %4 : vector<8x128xf32>
    %c0_5 = arith.constant 0 : index
    %c0_6 = arith.constant 0 : index
    %6 = vector.load %arg4[%c0_5, %c0_6] : memref<8x256xf32, #tpu.memory_space<vmem>>, vector<8x128xf32>
    tpu.vector_store %arg4[%c0_5, %c0_6], %5 {strides = array<i32>} : memref<8x256xf32, #tpu.memory_space<vmem>>, vector<8x128xf32>,
    %c0_7 = arith.constant 0 : index
    %c128 = arith.constant 128 : index
    %7 = vector.load %arg4[%c0_7, %c128] : memref<8x256xf32, #tpu.memory_space<vmem>>, vector<8x128xf32>
    tpu.vector_store %arg4[%c0_7, %c128], %5 {strides = array<i32>} : memref<8x256xf32, #tpu.memory_space<vmem>>, vector<8x128xf32>,
    return
  }
  func.func @transform_0(%arg0: i32) -> (i32, i32) {
    %c0_i32 = arith.constant 0 : i32
    %c0_i32_0 = arith.constant 0 : i32
    return %arg0, %c0_i32 : i32, i32
  }
  func.func @transform_1(%arg0: i32) -> (i32, i32) {
    %c0_i32 = arith.constant 0 : i32
    %c0_i32_0 = arith.constant 0 : i32
    %c0_i32_1 = arith.constant 0 : i32
    return %c0_i32, %c0_i32_0 : i32, i32
  }
  func.func @transform_2(%arg0: i32) -> (i32, i32) {
    %c0_i32 = arith.constant 0 : i32
    %c0_i32_0 = arith.constant 0 : i32
    %c0_i32_1 = arith.constant 0 : i32
    return %c0_i32, %c0_i32_0 : i32, i32
  }
  func.func @transform_3(%arg0: i32) -> (i32, i32) {
    %c0_i32 = arith.constant 0 : i32
    %c0_i32_0 = arith.constant 0 : i32
    return %arg0, %c0_i32 : i32, i32
  }
}

</mosaic_0001>

<llo_original>
// kernel: tpu_custom_call.1
$region0: #{tpu_custom_call.1}
  #allocation0 [shape = 'u32[]', space=smem, size = 0x4, offset = 0x4, fixed_abs, tag = 'smem constant byte address 0x4 - core index']
  #allocation1 [shape = 'u32[144,128]{1,0:T(1,128)}', space=vmem, size = 0x12000, scoped, tag = 'internal scratch']
  %s0 = inlined_call_operand.hbm [shape: f32[16,128], index: 0, kind: input, shape index: {}]
  %s1 = inlined_call_operand.hbm [shape: f32[128,128], index: 1, kind: input, shape index: {}]
  %s2 = inlined_call_operand.vmem [shape: f32[1,128], index: 2, kind: input, shape index: {}]
  %s3 = inlined_call_operand.hbm [shape: f32[16,256], index: 3, kind: output, shape index: {}]
  %s4 = sld [smem:[#allocation0]]
  $region53: #{tpu_custom_call.1} parent=0
    _
  %s6 = ssub.s32 1, %s4
  %s7 = scalar_select 0, %s6, %s4
  $region1: #{tpu_custom_call.1} parent=0
    #allocation2 [shape = 'u8[8192]{0}', space=vmem, size = 0x2000, scoped, tag = 'input window, operand 0']
    #allocation3 [shape = 's32[2]{0}', space=sflag, size = 0x8, scoped, tag = 'scoped memory for tpu_custom_call.1']
    #allocation4 [shape = 's32[2]{0}', space=sflag, size = 0x8, scoped, tag = 'scoped memory for tpu_custom_call.1']
    #allocation5 [shape = 'u8[65536]{0}', space=vmem, size = 0x10000, scoped, tag = 'input window, operand 1, single buffered']
    #allocation6 [shape = 's32[1]{0}', space=sflag, size = 0x4, scoped, tag = 'scoped memory for tpu_custom_call.1']
    #allocation7 [shape = 'u8[16384]{0}', space=vmem, size = 0x4000, scoped, tag = 'output window, operand 0']
    %8 = vsyncpa [#allocation3], 0
    %s9 = scalar_lea.sflag [#allocation3], 1
    %10 = vsyncpa %s9, 0
    %11 = vsyncpa [#allocation6], 0
    %12 = vsyncpa [#allocation4], 0
    %s13 = scalar_lea.sflag [#allocation4], 1
    %14 = vsyncpa %s13, 0
    loop: start=0, step=1, limit=4
    $region2: #{tpu_custom_call.1} parent=1 // loop_pre_header
      _
    $region3: #{tpu_custom_call.1} parent=1 // loop_header
      %s16 = sphi 0, %s20
      %p17 = scmp.ge.s32.totalorder %s16, 4
      %s26 = sphi 0, %s28
      %s29 = sphi 0, %s26
      %s30 = sphi 0, %s29
      %s46 = sphi 0, %s30
      %s50 = sphi 0, %s50
      %s52 = sphi 0, %s50
      %s53 = sphi 0, %s52
      %s67 = sphi 0, %s53
      %s71 = sphi 0, %s71
      %s73 = sphi 0, %s71
      %s74 = sphi 0, %s73
      %s88 = sphi 0, %s74
      %s94 = sphi 0, %s96
      %s97 = sphi 0, %s94
      %s98 = sphi 0, %s97
      %s114 = sphi 0, %s98
    $region4: #{tpu_custom_call.1} parent=1 // loop_header_branch
      %19 = sbr.rel (%p17) target = $region8
    $region5: #{tpu_custom_call.1} parent=1 // loop_body
      %s21 = ssub.s32 %s16, 1
      %s22 = ssub.s32 %s16, 2
      %s23 = sadd.s32 %s16, 1
      %s24 = ssub.s32 %s16, %s23
      %p25 = scmp.eq.s32.totalorder %s24, 0
      %s27 = sadd.s32 %s26, 1
      %s28 = scalar_select %p25, %s26, %s27
      %p31 = pneg %p25
      %p32 = scmp.eq.s32.totalorder %s16, 1
      %p33 = por %p31, %p32
      %p34 = scmp.ne.s32.totalorder %s26, %s29
      %p35 = scmp.eq.s32.totalorder %s16, 0
      %p36 = por %p34, %p35
      %p37 = scmp.ne.s32.totalorder %s26, %s29
      %p38 = scmp.eq.s32.totalorder %s21, 1
      %p39 = por %p37, %p38
      %p40 = scmp.ne.s32.totalorder %s29, %s30
      %p41 = scmp.eq.s32.totalorder %s21, 0
      %p42 = por %p40, %p41
      %p43 = scmp.ne.s32.totalorder %s29, %s30
      %p44 = scmp.eq.s32.totalorder %s22, 1
      %p45 = por %p43, %p44
      %p47 = scmp.ne.s32.totalorder %s30, %s46
      %p48 = scmp.eq.s32.totalorder %s22, 0
      %p49 = por %p47, %p48
      %s51 = sadd.s32 %s50, 1
      %p54 = scmp.eq.s32.totalorder %s16, 1
      %p55 = scmp.ne.s32.totalorder %s50, %s52
      %p56 = scmp.eq.s32.totalorder %s16, 0
      %p57 = por %p55, %p56
      %p58 = scmp.ne.s32.totalorder %s50, %s52
      %p59 = scmp.eq.s32.totalorder %s21, 1
      %p60 = por %p58, %p59
      %p61 = scmp.ne.s32.totalorder %s52, %s53
      %p62 = scmp.eq.s32.totalorder %s21, 0
      %p63 = por %p61, %p62
      %p64 = scmp.ne.s32.totalorder %s52, %s53
      %p65 = scmp.eq.s32.totalorder %s22, 1
      %p66 = por %p64, %p65
      %p68 = scmp.ne.s32.totalorder %s53, %s67
      %p69 = scmp.eq.s32.totalorder %s22, 0
      %p70 = por %p68, %p69
      %s72 = sadd.s32 %s71, 1
      %p75 = scmp.eq.s32.totalorder %s16, 1
      %p76 = scmp.ne.s32.totalorder %s71, %s73
      %p77 = scmp.eq.s32.totalorder %s16, 0
      %p78 = por %p76, %p77
      %p79 = scmp.ne.s32.totalorder %s71, %s73
      %p80 = scmp.eq.s32.totalorder %s21, 1
      %p81 = por %p79, %p80
      %p82 = scmp.ne.s32.totalorder %s73, %s74
      %p83 = scmp.eq.s32.totalorder %s21, 0
      %p84 = por %p82, %p83
      %p85 = scmp.ne.s32.totalorder %s73, %s74
      %p86 = scmp.eq.s32.totalorder %s22, 1
      %p87 = por %p85, %p86
      %p89 = scmp.ne.s32.totalorder %s74, %s88
      %p90 = scmp.eq.s32.totalorder %s22, 0
      %p91 = por %p89, %p90
      %s92 = ssub.s32 %s16, %s23
      %p93 = scmp.eq.s32.totalorder %s92, 0
      %s95 = sadd.s32 %s94, 1
      %s96 = scalar_select %p93, %s94, %s95
      %p99 = pneg %p93
      %p100 = scmp.eq.s32.totalorder %s16, 1
      %p101 = por %p99, %p100
      %p102 = scmp.ne.s32.totalorder %s94, %s97
      %p103 = scmp.eq.s32.totalorder %s16, 0
      %p104 = por %p102, %p103
      %p105 = scmp.ne.s32.totalorder %s94, %s97
      %p106 = scmp.eq.s32.totalorder %s21, 1
      %p107 = por %p105, %p106
      %p108 = scmp.ne.s32.totalorder %s97, %s98
      %p109 = scmp.eq.s32.totalorder %s21, 0
      %p110 = por %p108, %p109
      %p111 = scmp.ne.s32.totalorder %s97, %s98
      %p112 = scmp.eq.s32.totalorder %s22, 1
      %p113 = por %p111, %p112
      %p115 = scmp.ne.s32.totalorder %s98, %s114
      %p116 = scmp.eq.s32.totalorder %s22, 0
      %p117 = por %p115, %p116
      %p118 = scmp.le.s32.totalorder 1, %s16
      %p119 = scmp.lt.s32.totalorder %s16, 3
      %p120 = pnand %p118, %p119
      %p121 = pneg %p120
      // Predicated region
      $region9: #{tpu_custom_call.1} parent=5 // pred_check
        _
      $region10: #{tpu_custom_call.1} parent=5 // pred_check_branch
        %123 = sbr.rel (%p120) target = $region12
      $region11: #{tpu_custom_call.1} parent=5 // pred_region
        %s124 = ssub.s32 %s16, 1
        // Predicated region
        $region13: #{tpu_custom_call.1} parent=11 // pred_check
          %p125 = pneg %p63
        $region14: #{tpu_custom_call.1} parent=11 // pred_check_branch
          %127 = sbr.rel (%p125) target = $region16
        $region15: #{tpu_custom_call.1} parent=11 // pred_region
          %s129 = ssub.s32 2048, 2048
          %130 = vsyncadd [#allocation6], %s129
          %s131 = sshll.u32 [#allocation5], 4
          %s132 = int_to_ptr.vmem [resolvable:$true] %s131
          %137 = dma.hbm_to_vmem [thread:$0]  %s1, 2048, %s132, [#allocation6], 128, 128, 8
        $region16: #{tpu_custom_call.1} parent=11 // pred_fallthru
          _
        // Predicated region
        $region17: #{tpu_custom_call.1} parent=11 // pred_check
          %p138 = pneg %p84
        $region18: #{tpu_custom_call.1} parent=11 // pred_check_branch
          %140 = sbr.rel (%p138) target = $region20
        $region19: #{tpu_custom_call.1} parent=11 // pred_region
          _
        $region20: #{tpu_custom_call.1} parent=11 // pred_fallthru
          _
      $region12: #{tpu_custom_call.1} parent=5 // pred_fallthru
        _
      %p141 = scmp.lt.s32.totalorder %s16, 2
      // Predicated region
      $region21: #{tpu_custom_call.1} parent=5 // pred_check
        %p142 = pneg %p141
      $region22: #{tpu_custom_call.1} parent=5 // pred_check_branch
        %144 = sbr.rel (%p142) target = $region24
      $region23: #{tpu_custom_call.1} parent=5 // pred_region
        // Predicated region
        $region25: #{tpu_custom_call.1} parent=23 // pred_check
          %p145 = pneg %p36
        $region26: #{tpu_custom_call.1} parent=23 // pred_check_branch
          %147 = sbr.rel (%p145) target = $region28
        $region27: #{tpu_custom_call.1} parent=23 // pred_region
          %s148 = sand.u32 %s26, 1
          %s149 = scalar_lea.sflag [#allocation3], %s148
          %s150 = sand.u32 %s26, 1
          %s151 = smul.addr %s150, 8
          %s152 = scalar_lea.vmem [#allocation2], %s151
          %s154 = ssub.s32 128, 128
          %155 = vsyncadd %s149, %s154
          %s156 = smul.addr %s16, 128
          %s157 = scalar_lea.hbm %s0, %s156
          %s159 = sshll.u32 %s152, 4
          %s160 = int_to_ptr.vmem [resolvable:$true] %s159
          %162 = dma.hbm_to_vmem [thread:$0]  %s157, 128, %s160, %s149
        $region28: #{tpu_custom_call.1} parent=23 // pred_fallthru
          _
      $region24: #{tpu_custom_call.1} parent=5 // pred_fallthru
        _
      %p163 = scmp.le.s32.totalorder 1, %s16
      %p164 = scmp.lt.s32.totalorder %s16, 3
      %p165 = pnand %p163, %p164
      %p166 = pneg %p165
      // Predicated region
      $region29: #{tpu_custom_call.1} parent=5 // pred_check
        _
      $region30: #{tpu_custom_call.1} parent=5 // pred_check_branch
        %168 = sbr.rel (%p165) target = $region32
      $region31: #{tpu_custom_call.1} parent=5 // pred_region
        %s169 = ssub.s32 %s16, 1
        %s170 = sand.u32 %s29, 1
        %s171 = scalar_lea.sflag [#allocation3], %s170
        %s172 = sand.u32 %s29, 1
        %s173 = smul.addr %s172, 8
        %s174 = scalar_lea.vmem [#allocation2], %s173
        // Predicated region
        $region33: #{tpu_custom_call.1} parent=31 // pred_check
          %p175 = pneg %p42
        $region34: #{tpu_custom_call.1} parent=31 // pred_check_branch
          %177 = sbr.rel (%p175) target = $region36
        $region35: #{tpu_custom_call.1} parent=31 // pred_region
          %178 = dma.done %s171, 128
        $region36: #{tpu_custom_call.1} parent=31 // pred_fallthru
          _
        // Predicated region
        $region37: #{tpu_custom_call.1} parent=31 // pred_check
          %p179 = pneg %p63
        $region38: #{tpu_custom_call.1} parent=31 // pred_check_branch
          %181 = sbr.rel (%p179) target = $region40
        $region39: #{tpu_custom_call.1} parent=31 // pred_region
          %182 = dma.done [#allocation6], 2048
        $region40: #{tpu_custom_call.1} parent=31 // pred_fallthru
          _
        %s183 = sand.u32 %s29, 1
        %s184 = scalar_lea.sflag [#allocation3], %s183
        %s185 = sand.u32 %s29, 1
        %s186 = smul.addr %s185, 8
        %s187 = scalar_lea.vmem [#allocation2], %s186
        %p188 = pneg %p42
        %p189 = pneg %p39
        %p190 = pneg %p63
        %p191 = pneg %p60
        %p192 = pneg %p84
        %p193 = pneg %p81
        %p194 = pneg %p110
        %p195 = pneg %p107
        %s196 = sand.u32 %s97, 1
        %s197 = scalar_lea.sflag [#allocation4], %s196
        %s198 = sand.u32 %s97, 1
        %s199 = smul.addr %s198, 16
        %s200 = scalar_lea.vmem [#allocation7], %s199
        %v201 = vld [vmem:[%s174] sm:$0xff]
        %v202 = vld [vmem:[#allocation5] sm:$0xff]
        %v203 = vld [vmem:[#allocation5 + $0x8] sm:$0xff]
        %v204 = vld [vmem:[#allocation5 + $0x10] sm:$0xff]
        %v205 = vld [vmem:[#allocation5 + $0x18] sm:$0xff]
        %v206 = vld [vmem:[#allocation5 + $0x20] sm:$0xff]
        %v207 = vld [vmem:[#allocation5 + $0x28] sm:$0xff]
        %v208 = vld [vmem:[#allocation5 + $0x30] sm:$0xff]
        %v209 = vld [vmem:[#allocation5 + $0x38] sm:$0xff]
        %v210 = vld [vmem:[#allocation5 + $0x40] sm:$0xff]
        %v211 = vld [vmem:[#allocation5 + $0x48] sm:$0xff]
        %v212 = vld [vmem:[#allocation5 + $0x50] sm:$0xff]
        %v213 = vld [vmem:[#allocation5 + $0x58] sm:$0xff]
        %v214 = vld [vmem:[#allocation5 + $0x60] sm:$0xff]
        %v215 = vld [vmem:[#allocation5 + $0x68] sm:$0xff]
        %v216 = vld [vmem:[#allocation5 + $0x70] sm:$0xff]
        %v217 = vld [vmem:[#allocation5 + $0x78] sm:$0xff]
        %v218 = vld [vmem:[%s2] sm:$0x1]
        %v220 = vlaneseq
        %v221 = vshrl.u32 %v220, 7
        %v222 = vsub.s32 0, %v221
        %v223 = vrot.slane %v218, %v222
        %225 = vmatprep.subr.mxu0 0.0
        %226 = vmatpush1.msra.mxu0 %v217
        %227 = vmatprep.subr.mxu0 0.0
        %228 = vmatpush1.msra.mxu0 %v216
        %229 = vmatprep.subr.mxu0 0.0
        %230 = vmatpush1.msra.mxu0 %v215
        %231 = vmatprep.subr.mxu0 0.0
        %232 = vmatpush1.msra.mxu0 %v214
        %233 = vmatprep.subr.mxu0 0.0
        %234 = vmatpush1.msra.mxu0 %v213
        %235 = vmatprep.subr.mxu0 0.0
        %236 = vmatpush1.msra.mxu0 %v212
        %237 = vmatprep.subr.mxu0 0.0
        %238 = vmatpush1.msra.mxu0 %v211
        %239 = vmatprep.subr.mxu0 0.0
        %240 = vmatpush1.msra.mxu0 %v210
        %241 = vmatprep.subr.mxu0 0.0
        %242 = vmatpush1.msra.mxu0 %v209
        %243 = vmatprep.subr.mxu0 0.0
        %244 = vmatpush1.msra.mxu0 %v208
        %245 = vmatprep.subr.mxu0 0.0
        %246 = vmatpush1.msra.mxu0 %v207
        %247 = vmatprep.subr.mxu0 0.0
        %248 = vmatpush1.msra.mxu0 %v206
        %249 = vmatprep.subr.mxu0 0.0
        %250 = vmatpush1.msra.mxu0 %v205
        %251 = vmatprep.subr.mxu0 0.0
        %252 = vmatpush1.msra.mxu0 %v204
        %253 = vmatprep.subr.mxu0 0.0
        %254 = vmatpush1.msra.mxu0 %v203
        %255 = vmatprep.subr.mxu0 0.0
        %256 = vmatpush1.msra.mxu0 %v202
        %257 = vmatprep.subr.mxu0 0.0
        %258 = vmatpush2.msra.mxu0 0.0
        %259 = vmatprep.subr.mxu0 0.0
        %260 = vmatpush2.msra.mxu0 0.0
        %261 = vmatprep.subr.mxu0 0.0
        %262 = vmatpush2.msra.mxu0 0.0
        %263 = vmatprep.subr.mxu0 0.0
        %264 = vmatpush2.msra.mxu0 0.0
        %265 = vmatprep.subr.mxu0 0.0
        %266 = vmatpush2.msra.mxu0 0.0
        %267 = vmatprep.subr.mxu0 0.0
        %268 = vmatpush2.msra.mxu0 0.0
        %269 = vmatprep.subr.mxu0 0.0
        %270 = vmatpush2.msra.mxu0 0.0
        %271 = vmatprep.subr.mxu0 0.0
        %272 = vmatpush2.msra.mxu0 0.0
        %273 = vmatprep.subr.mxu0 0.0
        %274 = vmatpush2.msra.mxu0 0.0
        %275 = vmatprep.subr.mxu0 0.0
        %276 = vmatpush2.msra.mxu0 0.0
        %277 = vmatprep.subr.mxu0 0.0
        %278 = vmatpush2.msra.mxu0 0.0
        %279 = vmatprep.subr.mxu0 0.0
        %280 = vmatpush2.msra.mxu0 0.0
        %281 = vmatprep.subr.mxu0 0.0
        %282 = vmatpush2.msra.mxu0 0.0
        %283 = vmatprep.subr.mxu0 0.0
        %284 = vmatpush2.msra.mxu0 0.0
        %285 = vmatprep.subr.mxu0 0.0
        %286 = vmatpush2.msra.mxu0 0.0
        %287 = vmatprep.subr.mxu0 0.0
        %288 = vmatpush2.msra.mxu0 0.0
        %289 = vmatprep.mubr.f32.mxu0 0.0
        %290 = vmatmul.mubr.f32.gmra.mxu0 %v201
        %v291 = vpop.f32.mrf.mxu0
        %v292 = vadd.f32 %v223, %v291
        %v293 = vpop.f32.mrf.mxu0
        %294 = vdwg.mxu0
        %295 = vst [vmem:[%s200] sm:$0xff] %v292
        %296 = vst [vmem:[%s200 + $0x8] sm:$0xff] %v292
        %s297 = sand.u32 %s97, 1
        %s298 = scalar_lea.sflag [#allocation4], %s297
        %s299 = sand.u32 %s97, 1
        %s300 = smul.addr %s299, 16
        %s301 = scalar_lea.vmem [#allocation7], %s300
        // Predicated region
        $region41: #{tpu_custom_call.1} parent=31 // pred_check
          %p302 = pneg %p107
        $region42: #{tpu_custom_call.1} parent=31 // pred_check_branch
          %304 = sbr.rel (%p302) target = $region44
        $region43: #{tpu_custom_call.1} parent=31 // pred_region
          %s306 = ssub.s32 256, 256
          %307 = vsyncadd %s298, %s306
          %s308 = smul.addr %s21, 2
          %s309 = smul.addr %s308, 128
          %s310 = scalar_lea.hbm %s3, %s309
          %s312 = sshll.u32 %s301, 4
          %s313 = int_to_ptr.vmem [resolvable:$true] %s312
          %315 = dma.vmem_to_hbm [thread:$0]  %s313, 256, %s310, %s298
        $region44: #{tpu_custom_call.1} parent=31 // pred_fallthru
          _
      $region32: #{tpu_custom_call.1} parent=5 // pred_fallthru
        _
      %p316 = scmp.le.s32.totalorder 2, %s16
      // Predicated region
      $region45: #{tpu_custom_call.1} parent=5 // pred_check
        %p317 = pneg %p316
      $region46: #{tpu_custom_call.1} parent=5 // pred_check_branch
        %319 = sbr.rel (%p317) target = $region48
      $region47: #{tpu_custom_call.1} parent=5 // pred_region
        %s320 = ssub.s32 %s16, 2
        // Predicated region
        $region49: #{tpu_custom_call.1} parent=47 // pred_check
          %p321 = pneg %p113
        $region50: #{tpu_custom_call.1} parent=47 // pred_check_branch
          %323 = sbr.rel (%p321) target = $region52
        $region51: #{tpu_custom_call.1} parent=47 // pred_region
          %s324 = sand.u32 %s98, 1
          %s325 = scalar_lea.sflag [#allocation4], %s324
          %s326 = sand.u32 %s98, 1
          %s327 = smul.addr %s326, 16
          %s328 = scalar_lea.vmem [#allocation7], %s327
          %329 = dma.done %s325, 256
        $region52: #{tpu_custom_call.1} parent=47 // pred_fallthru
          _
      $region48: #{tpu_custom_call.1} parent=5 // pred_fallthru
        _
    $region6: #{tpu_custom_call.1} parent=1 // loop_footer
      %s20 = sadd.s32 1, %s16
    $region7: #{tpu_custom_call.1} parent=1 // loop_footer_branch
      %15 = sbr.rel target = $region3
    $region8: #{tpu_custom_call.1} parent=1 // loop_exit
      _
    %330 = vsyncpa [#allocation3], 1
    %s331 = scalar_lea.sflag [#allocation3], 1
    %332 = vsyncpa %s331, 1
    %333 = vsyncpa [#allocation6], 1
    %334 = vsyncpa [#allocation4], 1
    %s335 = scalar_lea.sflag [#allocation4], 1
    %336 = vsyncpa %s335, 1

// kernel: tpu_custom_call.1
$region0: #{tpu_custom_call.1}
  #allocation0 [shape = 'u32[]', space=smem, size = 0x4, offset = 0x4, fixed_abs, tag = 'smem constant byte address 0x4 - core index']
  #allocation1 [shape = 'u32[144,128]{1,0:T(1,128)}', space=vmem, size = 0x12000, scoped, tag = 'internal scratch']
  %s0 = inlined_call_operand.hbm [shape: f32[16,128], index: 0, kind: input, shape index: {}]
  %s1 = inlined_call_operand.hbm [shape: f32[128,128], index: 1, kind: input, shape index: {}]
  %s2 = inlined_call_operand.vmem [shape: f32[1,128], index: 2, kind: input, shape index: {}]
  %s3 = inlined_call_operand.hbm [shape: f32[16,256], index: 3, kind: output, shape index: {}]
  %s4 = sld [smem:[#allocation0]]
  $region53: #{tpu_custom_call.1} parent=0
    _
  %s6 = ssub.s32 1, %s4
  %s7 = scalar_select 0, %s6, %s4
  $region1: #{tpu_custom_call.1} parent=0
    #allocation2 [shape = 'u8[8192]{0}', space=vmem, size = 0x2000, scoped, tag = 'input window, operand 0']
    #allocation3 [shape = 's32[2]{0}', space=sflag, size = 0x8, scoped, tag = 'scoped memory for tpu_custom_call.1']
    #allocation4 [shape = 's32[2]{0}', space=sflag, size = 0x8, scoped, tag = 'scoped memory for tpu_custom_call.1']
    #allocation5 [shape = 'u8[65536]{0}', space=vmem, size = 0x10000, scoped, tag = 'input window, operand 1, single buffered']
    #allocation6 [shape = 's32[1]{0}', space=sflag, size = 0x4, scoped, tag = 'scoped memory for tpu_custom_call.1']
    #allocation7 [shape = 'u8[16384]{0}', space=vmem, size = 0x4000, scoped, tag = 'output window, operand 0']
    %8 = vsyncpa [#allocation3], 0
    %s9 = scalar_lea.sflag [#allocation3], 1
    %10 = vsyncpa %s9, 0
    %11 = vsyncpa [#allocation6], 0
    %12 = vsyncpa [#allocation4], 0
    %s13 = scalar_lea.sflag [#allocation4], 1
    %14 = vsyncpa %s13, 0
    loop: start=0, step=1, limit=4
    $region2: #{tpu_custom_call.1} parent=1 // loop_pre_header
      _
    $region3: #{tpu_custom_call.1} parent=1 // loop_header
      %s16 = sphi 0, %s20
      %p17 = scmp.ge.s32.totalorder %s16, 4
      %s26 = sphi 0, %s28
      %s29 = sphi 0, %s26
      %s30 = sphi 0, %s29
      %s46 = sphi 0, %s30
      %s50 = sphi 0, %s50
      %s52 = sphi 0, %s50
      %s53 = sphi 0, %s52
      %s67 = sphi 0, %s53
      %s71 = sphi 0, %s71
      %s73 = sphi 0, %s71
      %s74 = sphi 0, %s73
      %s88 = sphi 0, %s74
      %s94 = sphi 0, %s96
      %s97 = sphi 0, %s94
      %s98 = sphi 0, %s97
      %s114 = sphi 0, %s98
    $region4: #{tpu_custom_call.1} parent=1 // loop_header_branch
      %19 = sbr.rel (%p17) target = $region8
    $region5: #{tpu_custom_call.1} parent=1 // loop_body
      %s21 = ssub.s32 %s16, 1
      %s22 = ssub.s32 %s16, 2
      %s23 = sadd.s32 %s16, 1
      %s24 = ssub.s32 %s16, %s23
      %p25 = scmp.eq.s32.totalorder %s24, 0
      %s27 = sadd.s32 %s26, 1
      %s28 = scalar_select %p25, %s26, %s27
      %p31 = pneg %p25
      %p32 = scmp.eq.s32.totalorder %s16, 1
      %p33 = por %p31, %p32
      %p34 = scmp.ne.s32.totalorder %s26, %s29
      %p35 = scmp.eq.s32.totalorder %s16, 0
      %p36 = por %p34, %p35
      %p37 = scmp.ne.s32.totalorder %s26, %s29
      %p38 = scmp.eq.s32.totalorder %s21, 1
      %p39 = por %p37, %p38
      %p40 = scmp.ne.s32.totalorder %s29, %s30
      %p41 = scmp.eq.s32.totalorder %s21, 0
      %p42 = por %p40, %p41
      %p43 = scmp.ne.s32.totalorder %s29, %s30
      %p44 = scmp.eq.s32.totalorder %s22, 1
      %p45 = por %p43, %p44
      %p47 = scmp.ne.s32.totalorder %s30, %s46
      %p48 = scmp.eq.s32.totalorder %s22, 0
      %p49 = por %p47, %p48
      %s51 = sadd.s32 %s50, 1
      %p54 = scmp.eq.s32.totalorder %s16, 1
      %p55 = scmp.ne.s32.totalorder %s50, %s52
      %p56 = scmp.eq.s32.totalorder %s16, 0
      %p57 = por %p55, %p56
      %p58 = scmp.ne.s32.totalorder %s50, %s52
      %p59 = scmp.eq.s32.totalorder %s21, 1
      %p60 = por %p58, %p59
      %p61 = scmp.ne.s32.totalorder %s52, %s53
      %p62 = scmp.eq.s32.totalorder %s21, 0
      %p63 = por %p61, %p62
      %p64 = scmp.ne.s32.totalorder %s52, %s53
      %p65 = scmp.eq.s32.totalorder %s22, 1
      %p66 = por %p64, %p65
      %p68 = scmp.ne.s32.totalorder %s53, %s67
      %p69 = scmp.eq.s32.totalorder %s22, 0
      %p70 = por %p68, %p69
      %s72 = sadd.s32 %s71, 1
      %p75 = scmp.eq.s32.totalorder %s16, 1
      %p76 = scmp.ne.s32.totalorder %s71, %s73
      %p77 = scmp.eq.s32.totalorder %s16, 0
      %p78 = por %p76, %p77
      %p79 = scmp.ne.s32.totalorder %s71, %s73
      %p80 = scmp.eq.s32.totalorder %s21, 1
      %p81 = por %p79, %p80
      %p82 = scmp.ne.s32.totalorder %s73, %s74
      %p83 = scmp.eq.s32.totalorder %s21, 0
      %p84 = por %p82, %p83
      %p85 = scmp.ne.s32.totalorder %s73, %s74
      %p86 = scmp.eq.s32.totalorder %s22, 1
      %p87 = por %p85, %p86
      %p89 = scmp.ne.s32.totalorder %s74, %s88
      %p90 = scmp.eq.s32.totalorder %s22, 0
      %p91 = por %p89, %p90
      %s92 = ssub.s32 %s16, %s23
      %p93 = scmp.eq.s32.totalorder %s92, 0
      %s95 = sadd.s32 %s94, 1
      %s96 = scalar_select %p93, %s94, %s95
      %p99 = pneg %p93
      %p100 = scmp.eq.s32.totalorder %s16, 1
      %p101 = por %p99, %p100
      %p102 = scmp.ne.s32.totalorder %s94, %s97
      %p103 = scmp.eq.s32.totalorder %s16, 0
      %p104 = por %p102, %p103
      %p105 = scmp.ne.s32.totalorder %s94, %s97
      %p106 = scmp.eq.s32.totalorder %s21, 1
      %p107 = por %p105, %p106
      %p108 = scmp.ne.s32.totalorder %s97, %s98
      %p109 = scmp.eq.s32.totalorder %s21, 0
      %p110 = por %p108, %p109
      %p111 = scmp.ne.s32.totalorder %s97, %s98
      %p112 = scmp.eq.s32.totalorder %s22, 1
      %p113 = por %p111, %p112
      %p115 = scmp.ne.s32.totalorder %s98, %s114
      %p116 = scmp.eq.s32.totalorder %s22, 0
      %p117 = por %p115, %p116
      %p118 = scmp.le.s32.totalorder 1, %s16
      %p119 = scmp.lt.s32.totalorder %s16, 3
      %p120 = pnand %p118, %p119
      %p121 = pneg %p120
      // Predicated region
      $region9: #{tpu_custom_call.1} parent=5 // pred_check
        _
      $region10: #{tpu_custom_call.1} parent=5 // pred_check_branch
        %123 = sbr.rel (%p120) target = $region12
      $region11: #{tpu_custom_call.1} parent=5 // pred_region
        %s124 = ssub.s32 %s16, 1
        // Predicated region
        $region13: #{tpu_custom_call.1} parent=11 // pred_check
          %p125 = pneg %p63
        $region14: #{tpu_custom_call.1} parent=11 // pred_check_branch
          %127 = sbr.rel (%p125) target = $region16
        $region15: #{tpu_custom_call.1} parent=11 // pred_region
          %s129 = ssub.s32 2048, 2048
          %130 = vsyncadd [#allocation6], %s129
          %s131 = sshll.u32 [#allocation5], 4
          %s132 = int_to_ptr.vmem [resolvable:$true] %s131
          %137 = dma.hbm_to_vmem [thread:$0]  %s1, 2048, %s132, [#allocation6], 128, 128, 8
        $region16: #{tpu_custom_call.1} parent=11 // pred_fallthru
          _
        // Predicated region
        $region17: #{tpu_custom_call.1} parent=11 // pred_check
          %p138 = pneg %p84
        $region18: #{tpu_custom_call.1} parent=11 // pred_check_branch
          %140 = sbr.rel (%p138) target = $region20
        $region19: #{tpu_custom_call.1} parent=11 // pred_region
          _
        $region20: #{tpu_custom_call.1} parent=11 // pred_fallthru
          _
      $region12: #{tpu_custom_call.1} parent=5 // pred_fallthru
        _
      %p141 = scmp.lt.s32.totalorder %s16, 2
      // Predicated region
      $region21: #{tpu_custom_call.1} parent=5 // pred_check
        %p142 = pneg %p141
      $region22: #{tpu_custom_call.1} parent=5 // pred_check_branch
        %144 = sbr.rel (%p142) target = $region24
      $region23: #{tpu_custom_call.1} parent=5 // pred_region
        // Predicated region
        $region25: #{tpu_custom_call.1} parent=23 // pred_check
          %p145 = pneg %p36
        $region26: #{tpu_custom_call.1} parent=23 // pred_check_branch
          %147 = sbr.rel (%p145) target = $region28
        $region27: #{tpu_custom_call.1} parent=23 // pred_region
          %s148 = sand.u32 %s26, 1
          %s149 = scalar_lea.sflag [#allocation3], %s148
          %s150 = sand.u32 %s26, 1
          %s151 = smul.addr %s150, 8
          %s152 = scalar_lea.vmem [#allocation2], %s151
          %s154 = ssub.s32 128, 128
          %155 = vsyncadd %s149, %s154
          %s156 = smul.addr %s16, 128
          %s157 = scalar_lea.hbm %s0, %s156
          %s159 = sshll.u32 %s152, 4
          %s160 = int_to_ptr.vmem [resolvable:$true] %s159
          %162 = dma.hbm_to_vmem [thread:$0]  %s157, 128, %s160, %s149
        $region28: #{tpu_custom_call.1} parent=23 // pred_fallthru
          _
      $region24: #{tpu_custom_call.1} parent=5 // pred_fallthru
        _
      %p163 = scmp.le.s32.totalorder 1, %s16
      %p164 = scmp.lt.s32.totalorder %s16, 3
      %p165 = pnand %p163, %p164
      %p166 = pneg %p165
      // Predicated region
      $region29: #{tpu_custom_call.1} parent=5 // pred_check
        _
      $region30: #{tpu_custom_call.1} parent=5 // pred_check_branch
        %168 = sbr.rel (%p165) target = $region32
      $region31: #{tpu_custom_call.1} parent=5 // pred_region
        %s169 = ssub.s32 %s16, 1
        %s170 = sand.u32 %s29, 1
        %s171 = scalar_lea.sflag [#allocation3], %s170
        %s172 = sand.u32 %s29, 1
        %s173 = smul.addr %s172, 8
        %s174 = scalar_lea.vmem [#allocation2], %s173
        // Predicated region
        $region33: #{tpu_custom_call.1} parent=31 // pred_check
          %p175 = pneg %p42
        $region34: #{tpu_custom_call.1} parent=31 // pred_check_branch
          %177 = sbr.rel (%p175) target = $region36
        $region35: #{tpu_custom_call.1} parent=31 // pred_region
          %178 = dma.done %s171, 128
        $region36: #{tpu_custom_call.1} parent=31 // pred_fallthru
          _
        // Predicated region
        $region37: #{tpu_custom_call.1} parent=31 // pred_check
          %p179 = pneg %p63
        $region38: #{tpu_custom_call.1} parent=31 // pred_check_branch
          %181 = sbr.rel (%p179) target = $region40
        $region39: #{tpu_custom_call.1} parent=31 // pred_region
          %182 = dma.done [#allocation6], 2048
        $region40: #{tpu_custom_call.1} parent=31 // pred_fallthru
          _
        %s183 = sand.u32 %s29, 1
        %s184 = scalar_lea.sflag [#allocation3], %s183
        %s185 = sand.u32 %s29, 1
        %s186 = smul.addr %s185, 8
        %s187 = scalar_lea.vmem [#allocation2], %s186
        %p188 = pneg %p42
        %p189 = pneg %p39
        %p190 = pneg %p63
        %p191 = pneg %p60
        %p192 = pneg %p84
        %p193 = pneg %p81
        %p194 = pneg %p110
        %p195 = pneg %p107
        %s196 = sand.u32 %s97, 1
        %s197 = scalar_lea.sflag [#allocation4], %s196
        %s198 = sand.u32 %s97, 1
        %s199 = smul.addr %s198, 16
        %s200 = scalar_lea.vmem [#allocation7], %s199
        %v201 = vld [vmem:[%s174] sm:$0xff]
        %v202 = vld [vmem:[#allocation5] sm:$0xff]
        %v203 = vld [vmem:[#allocation5 + $0x8] sm:$0xff]
        %v204 = vld [vmem:[#allocation5 + $0x10] sm:$0xff]
        %v205 = vld [vmem:[#allocation5 + $0x18] sm:$0xff]
        %v206 = vld [vmem:[#allocation5 + $0x20] sm:$0xff]
        %v207 = vld [vmem:[#allocation5 + $0x28] sm:$0xff]
        %v208 = vld [vmem:[#allocation5 + $0x30] sm:$0xff]
        %v209 = vld [vmem:[#allocation5 + $0x38] sm:$0xff]
        %v210 = vld [vmem:[#allocation5 + $0x40] sm:$0xff]
        %v211 = vld [vmem:[#allocation5 + $0x48] sm:$0xff]
        %v212 = vld [vmem:[#allocation5 + $0x50] sm:$0xff]
        %v213 = vld [vmem:[#allocation5 + $0x58] sm:$0xff]
        %v214 = vld [vmem:[#allocation5 + $0x60] sm:$0xff]
        %v215 = vld [vmem:[#allocation5 + $0x68] sm:$0xff]
        %v216 = vld [vmem:[#allocation5 + $0x70] sm:$0xff]
        %v217 = vld [vmem:[#allocation5 + $0x78] sm:$0xff]
        %v218 = vld [vmem:[%s2] sm:$0x1]
        %v220 = vlaneseq
        %v221 = vshrl.u32 %v220, 7
        %v222 = vsub.s32 0, %v221
        %v223 = vrot.slane %v218, %v222
        %225 = vmatprep.subr.mxu0 0.0
        %226 = vmatpush1.msra.mxu0 %v217
        %227 = vmatprep.subr.mxu0 0.0
        %228 = vmatpush1.msra.mxu0 %v216
        %229 = vmatprep.subr.mxu0 0.0
        %230 = vmatpush1.msra.mxu0 %v215
        %231 = vmatprep.subr.mxu0 0.0
        %232 = vmatpush1.msra.mxu0 %v214
        %233 = vmatprep.subr.mxu0 0.0
        %234 = vmatpush1.msra.mxu0 %v213
        %235 = vmatprep.subr.mxu0 0.0
        %236 = vmatpush1.msra.mxu0 %v212
        %237 = vmatprep.subr.mxu0 0.0
        %238 = vmatpush1.msra.mxu0 %v211
        %239 = vmatprep.subr.mxu0 0.0
        %240 = vmatpush1.msra.mxu0 %v210
        %241 = vmatprep.subr.mxu0 0.0
        %242 = vmatpush1.msra.mxu0 %v209
        %243 = vmatprep.subr.mxu0 0.0
        %244 = vmatpush1.msra.mxu0 %v208
        %245 = vmatprep.subr.mxu0 0.0
        %246 = vmatpush1.msra.mxu0 %v207
        %247 = vmatprep.subr.mxu0 0.0
        %248 = vmatpush1.msra.mxu0 %v206
        %249 = vmatprep.subr.mxu0 0.0
        %250 = vmatpush1.msra.mxu0 %v205
        %251 = vmatprep.subr.mxu0 0.0
        %252 = vmatpush1.msra.mxu0 %v204
        %253 = vmatprep.subr.mxu0 0.0
        %254 = vmatpush1.msra.mxu0 %v203
        %255 = vmatprep.subr.mxu0 0.0
        %256 = vmatpush1.msra.mxu0 %v202
        %257 = vmatprep.subr.mxu0 0.0
        %258 = vmatpush2.msra.mxu0 0.0
        %259 = vmatprep.subr.mxu0 0.0
        %260 = vmatpush2.msra.mxu0 0.0
        %261 = vmatprep.subr.mxu0 0.0
        %262 = vmatpush2.msra.mxu0 0.0
        %263 = vmatprep.subr.mxu0 0.0
        %264 = vmatpush2.msra.mxu0 0.0
        %265 = vmatprep.subr.mxu0 0.0
        %266 = vmatpush2.msra.mxu0 0.0
        %267 = vmatprep.subr.mxu0 0.0
        %268 = vmatpush2.msra.mxu0 0.0
        %269 = vmatprep.subr.mxu0 0.0
        %270 = vmatpush2.msra.mxu0 0.0
        %271 = vmatprep.subr.mxu0 0.0
        %272 = vmatpush2.msra.mxu0 0.0
        %273 = vmatprep.subr.mxu0 0.0
        %274 = vmatpush2.msra.mxu0 0.0
        %275 = vmatprep.subr.mxu0 0.0
        %276 = vmatpush2.msra.mxu0 0.0
        %277 = vmatprep.subr.mxu0 0.0
        %278 = vmatpush2.msra.mxu0 0.0
        %279 = vmatprep.subr.mxu0 0.0
        %280 = vmatpush2.msra.mxu0 0.0
        %281 = vmatprep.subr.mxu0 0.0
        %282 = vmatpush2.msra.mxu0 0.0
        %283 = vmatprep.subr.mxu0 0.0
        %284 = vmatpush2.msra.mxu0 0.0
        %285 = vmatprep.subr.mxu0 0.0
        %286 = vmatpush2.msra.mxu0 0.0
        %287 = vmatprep.subr.mxu0 0.0
        %288 = vmatpush2.msra.mxu0 0.0
        %289 = vmatprep.mubr.f32.mxu0 0.0
        %290 = vmatmul.mubr.f32.gmra.mxu0 %v201
        %v291 = vpop.f32.mrf.mxu0
        %v292 = vadd.f32 %v223, %v291
        %v293 = vpop.f32.mrf.mxu0
        %294 = vdwg.mxu0
        %295 = vst [vmem:[%s200] sm:$0xff] %v292
        %296 = vst [vmem:[%s200 + $0x8] sm:$0xff] %v292
        %s297 = sand.u32 %s97, 1
        %s298 = scalar_lea.sflag [#allocation4], %s297
        %s299 = sand.u32 %s97, 1
        %s300 = smul.addr %s299, 16
        %s301 = scalar_lea.vmem [#allocation7], %s300
        // Predicated region
        $region41: #{tpu_custom_call.1} parent=31 // pred_check
          %p302 = pneg %p107
        $region42: #{tpu_custom_call.1} parent=31 // pred_check_branch
          %304 = sbr.rel (%p302) target = $region44
        $region43: #{tpu_custom_call.1} parent=31 // pred_region
          %s306 = ssub.s32 256, 256
          %307 = vsyncadd %s298, %s306
          %s308 = smul.addr %s21, 2
          %s309 = smul.addr %s308, 128
          %s310 = scalar_lea.hbm %s3, %s309
          %s312 = sshll.u32 %s301, 4
          %s313 = int_to_ptr.vmem [resolvable:$true] %s312
          %315 = dma.vmem_to_hbm [thread:$0]  %s313, 256, %s310, %s298
        $region44: #{tpu_custom_call.1} parent=31 // pred_fallthru
          _
      $region32: #{tpu_custom_call.1} parent=5 // pred_fallthru
        _
      %p316 = scmp.le.s32.totalorder 2, %s16
      // Predicated region
      $region45: #{tpu_custom_call.1} parent=5 // pred_check
        %p317 = pneg %p316
      $region46: #{tpu_custom_call.1} parent=5 // pred_check_branch
        %319 = sbr.rel (%p317) target = $region48
      $region47: #{tpu_custom_call.1} parent=5 // pred_region
        %s320 = ssub.s32 %s16, 2
        // Predicated region
        $region49: #{tpu_custom_call.1} parent=47 // pred_check
          %p321 = pneg %p113
        $region50: #{tpu_custom_call.1} parent=47 // pred_check_branch
          %323 = sbr.rel (%p321) target = $region52
        $region51: #{tpu_custom_call.1} parent=47 // pred_region
          %s324 = sand.u32 %s98, 1
          %s325 = scalar_lea.sflag [#allocation4], %s324
          %s326 = sand.u32 %s98, 1
          %s327 = smul.addr %s326, 16
          %s328 = scalar_lea.vmem [#allocation7], %s327
          %329 = dma.done %s325, 256
        $region52: #{tpu_custom_call.1} parent=47 // pred_fallthru
          _
      $region48: #{tpu_custom_call.1} parent=5 // pred_fallthru
        _
    $region6: #{tpu_custom_call.1} parent=1 // loop_footer
      %s20 = sadd.s32 1, %s16
    $region7: #{tpu_custom_call.1} parent=1 // loop_footer_branch
      %15 = sbr.rel target = $region3
    $region8: #{tpu_custom_call.1} parent=1 // loop_exit
      _
    %330 = vsyncpa [#allocation3], 1
    %s331 = scalar_lea.sflag [#allocation3], 1
    %332 = vsyncpa %s331, 1
    %333 = vsyncpa [#allocation6], 1
    %334 = vsyncpa [#allocation4], 1
    %s335 = scalar_lea.sflag [#allocation4], 1
    %336 = vsyncpa %s335, 1

</llo_original>
